<compile_context>
chip_gen: v7x
topology: tpu7x:2x2x1
jax: 0.10.0
libtpu: 0.0.40
codegen_flags: <defaults>
</compile_context>

<pallas_src>
import functools

import jax
import jax.numpy as jnp
from jax.experimental import pallas as pl
from jax.experimental.pallas import tpu as pltpu


def _round_up(x: int, m: int) -> int:
    return ((x + m - 1) // m) * m


def _round_down(x: int, m: int) -> int:
    return (x // m) * m


def _vmem_capacity_bytes() -> int:
    try:
        return int(pltpu.get_tpu_info().vmem_capacity_bytes)
    except Exception:
        return 64 << 20  # conservative fallback (v7x per-TC VMEM)


_VMEM_CAPACITY = _vmem_capacity_bytes()


# ---------------------------------------------------------------------------
# Kernel
# ---------------------------------------------------------------------------
def _feat_embedding_kernel(x_ref, gamma_ref, beta_ref, w_ref, bias_ref, o_ref,
                           *, d_feat: int, eps: float, approx_recip: bool):
    # (row_tile, d_feat) rows tile; LayerNorm math in f32.
    x = x_ref[...].astype(jnp.float32)

    # --- LayerNorm (unbiased std, eps added to std) ---
    mean = jnp.mean(x, axis=-1, keepdims=True)
    centered = x - mean
    var_unbiased = jnp.sum(centered * centered, axis=-1, keepdims=True) * (1.0 / (d_feat - 1))
    std = jnp.sqrt(var_unbiased)
    inv = pl.reciprocal(std + eps, approx=approx_recip)   # EUP slot
    normed = centered * (gamma_ref[...] * inv) + beta_ref[...]

    # TODO(synk): nn.Dropout is identity at inference; training-mode stochastic mask omitted.

    # --- Linear: normed @ W_block + b_block (MXU, f32 accumulation) ---
    y = jnp.dot(normed.astype(w_ref.dtype), w_ref[...],
                preferred_element_type=jnp.float32)
    o_ref[...] = (y + bias_ref[...]).astype(o_ref.dtype)


# ---------------------------------------------------------------------------
# One-time weight preprocessing (hoist out of the per-call path)
# ---------------------------------------------------------------------------
def prepare_feat_embedding_params(gamma, beta, w, bias, *, mxu_dtype=jnp.bfloat16):
    """Pre-process parameters once and reuse across calls.

    w: (d_feat, d_model) — i.e. the transpose of the PyTorch nn.Linear weight.
    mxu_dtype: matmul-input dtype (bf16 default for MXU throughput); None keeps f32.
    """
    d_feat, d_model = w.shape
    w_p = w if mxu_dtype is None else w.astype(mxu_dtype)
    gamma2 = gamma.astype(jnp.float32).reshape(1, d_feat)
    beta2 = beta.astype(jnp.float32).reshape(1, d_feat)
    bias2 = bias.astype(jnp.float32).reshape(1, d_model)
    return gamma2, beta2, w_p, bias2


# ---------------------------------------------------------------------------
# Apply (jit-compatible; all tiling logic is static shape arithmetic)
# ---------------------------------------------------------------------------
def feat_embedding_apply(x, gamma2, beta2, w_p, bias2, *, eps=1e-6,
                         row_tile=None, col_tile=None,
                         vmem_budget_bytes=None, approx_recip=None):
    """x: (B, T, d_feat) -> (B, T, d_model), using prepared params."""
    B, T, d_feat = x.shape
    assert d_feat >= 2, "unbiased std (ddof=1) requires d_feat >= 2"
    d_model = w_p.shape[1]
    rows = B * T

    x_bytes = x.dtype.itemsize
    w_bytes = w_p.dtype.itemsize
    out_bytes = x.dtype.itemsize

    if approx_recip is None:
        # Exact reciprocal on the exact (f32-MXU) path; approx (EUP vrcp) on bf16 path.
        approx_recip = w_bytes < 4

    # Generation-aware VMEM budget (v7x: 64 MiB/TC, v5e/v6e: 128 MiB).
    cap = _VMEM_CAPACITY
    budget = (48 << 20) if vmem_budget_bytes is None else int(vmem_budget_bytes)
    budget = min(budget, int(cap * 0.60))

    # --- N (d_model) tiling: stream W in column blocks only when W is large ---
    if col_tile is None:
        w_total = d_feat * d_model * w_bytes
        w_budget = min(12 << 20, budget // 3)
        if w_total <= w_budget:
            col_tile = d_model
        else:
            col_tile = max(128, _round_down(w_budget // (2 * d_feat * w_bytes), 128))
            col_tile = min(col_tile, d_model)
    col_tile = int(col_tile)
    col_steps = pl.cdiv(d_model, col_tile)
    if col_steps == 1:
        col_tile = d_model

    # --- Row tile sized by bytes (amortize ~0.35us/step pipeline overhead) ---
    if row_tile is None:
        per_row = (2 * d_feat * x_bytes + 2 * col_tile * out_bytes    # double-buffered x / out
                   + 3 * d_feat * 4 + col_tile * 4)                   # in-kernel f32 temporaries
        fixed = (2 * d_feat * col_tile * w_bytes                      # resident W block
                 + 4 * (2 * d_feat + col_tile) * 4                    # gamma/beta/bias
                 + (2 << 20))                                         # slack
        row_tile = max(8, (budget - fixed) // per_row)
    row_tile = max(8, min(_round_down(int(row_tile), 8), 8192, _round_up(rows, 8)))
    # v7x has 2 TensorCores: keep >= 2 row-grid steps so the "parallel" axis can shard.
    if rows >= 1024:
        row_tile = min(row_tile, _round_up(pl.cdiv(rows, 2), 8))
    row_steps = pl.cdiv(rows, row_tile)

    # Always set the VMEM limit explicitly (scoped default is 16 MiB on v5e).
    footprint = (2 * row_tile * (d_feat * x_bytes + col_tile * out_bytes)
                 + row_tile * (3 * d_feat * 4 + col_tile * 4)
                 + 2 * d_feat * col_tile * w_bytes
                 + 4 * (2 * d_feat + col_tile) * 4)
    vmem_limit = int(min(max(footprint + (8 << 20), 24 << 20), int(cap * 0.85)))

    x2 = x.reshape(rows, d_feat)
    kernel = functools.partial(_feat_embedding_kernel, d_feat=d_feat, eps=eps,
                               approx_recip=approx_recip)

    if col_steps == 1:
        grid = (row_steps,)
        in_specs = [
            pl.BlockSpec((row_tile, d_feat), lambda i: (i, 0)),   # x rows tile
            pl.BlockSpec((1, d_feat), lambda i: (0, 0)),          # gamma (grid-invariant)
            pl.BlockSpec((1, d_feat), lambda i: (0, 0)),          # beta
            pl.BlockSpec((d_feat, col_tile), lambda i: (0, 0)),   # W (resident)
            pl.BlockSpec((1, col_tile), lambda i: (0, 0)),        # bias
        ]
        out_specs = pl.BlockSpec((row_tile, col_tile), lambda i: (i, 0))
        dims = ("parallel",)
    else:
        # Columns OUTERMOST: each W/bias block is DMA'd exactly once and stays
        # resident across the inner row sweep; x block index is constant over rows? no —
        # x varies over the inner (row) axis, W/bias only over the outer (col) axis.
        grid = (col_steps, row_steps)
        in_specs = [
            pl.BlockSpec((row_tile, d_feat), lambda c, r: (r, 0)),
            pl.BlockSpec((1, d_feat), lambda c, r: (0, 0)),
            pl.BlockSpec((1, d_feat), lambda c, r: (0, 0)),
            pl.BlockSpec((d_feat, col_tile), lambda c, r: (0, c)),
            pl.BlockSpec((1, col_tile), lambda c, r: (0, c)),
        ]
        out_specs = pl.BlockSpec((row_tile, col_tile), lambda c, r: (r, c))
        dims = ("parallel", "parallel")

    cost = pl.CostEstimate(
        flops=2 * rows * d_feat * d_model + 8 * rows * d_feat,
        transcendentals=2 * rows,  # sqrt + reciprocal per row
        bytes_accessed=(rows * d_feat * x_bytes
                        + d_feat * d_model * w_bytes
                        + rows * d_model * out_bytes
                        + (2 * d_feat + d_model) * 4),
    )

    out2 = pl.pallas_call(
        kernel,
        out_shape=jax.ShapeDtypeStruct((rows, d_model), x.dtype),
        grid_spec=pl.GridSpec(grid=grid, in_specs=in_specs, out_specs=out_specs),
        compiler_params=pltpu.CompilerParams(
            dimension_semantics=dims, vmem_limit_bytes=vmem_limit),
        cost_estimate=cost,
    )(x2, gamma2, beta2, w_p, bias2)

    return out2.reshape(B, T, d_model)


def feat_embedding(x, gamma, beta, w, bias, *, eps=1e-6, mxu_dtype=jnp.bfloat16, **kw):
    """Convenience one-shot wrapper (prep + apply). Prefer prepare_* + apply for reuse."""
    params = prepare_feat_embedding_params(gamma, beta, w, bias, mxu_dtype=mxu_dtype)
    return feat_embedding_apply(x, *params, eps=eps, **kw)


# ---------------------------------------------------------------------------
# Reference + test
# ---------------------------------------------------------------------------
def _reference(x, gamma, beta, w, bias, eps=1e-6):
    """Pure-JAX reference matching the PyTorch module (eval mode)."""
    xf = x.astype(jnp.float32)
    mean = jnp.mean(xf, axis=-1, keepdims=True)
    std = jnp.sqrt(jnp.sum((xf - mean) ** 2, axis=-1, keepdims=True) / (x.shape[-1] - 1))
    normed = gamma * (xf - mean) / (std + eps) + beta
    return (normed @ w + bias).astype(x.dtype)


if __name__ == "__main__":
    # Small shapes consistent with the module: (batch, seq, per-frame feat) -> d_model.
    B, T, d_feat, d_model = 2, 8, 32, 32

    key = jax.random.PRNGKey(0)
    kx, kg, kb, kw, kbias = jax.random.split(key, 5)

    x = jax.random.normal(kx, (B, T, d_feat), dtype=jnp.float32)
    gamma = jnp.ones((d_feat,), jnp.float32) + 0.1 * jax.random.normal(kg, (d_feat,))
    beta = 0.1 * jax.random.normal(kb, (d_feat,))
    w = jax.random.normal(kw, (d_feat, d_model), dtype=jnp.float32) / jnp.sqrt(d_feat)
    bias = 0.1 * jax.random.normal(kbias, (d_model,), dtype=jnp.float32)

    ref = _reference(x, gamma, beta, w, bias)

    # Default fast path: bf16 MXU inputs, params prepared once, jitted apply.
    params_bf16 = prepare_feat_embedding_params(gamma, beta, w, bias, mxu_dtype=jnp.bfloat16)
    apply_fn = jax.jit(functools.partial(feat_embedding_apply, eps=1e-6))
    out = jax.block_until_ready(apply_fn(x, *params_bf16))
    assert out.shape == (B, T, d_model)
    assert jnp.allclose(out, ref, atol=5e-2, rtol=5e-2), "bf16 path mismatch vs reference"

    # Exact f32 MXU path (exact module semantics).
    out_f32 = jax.block_until_ready(feat_embedding(x, gamma, beta, w, bias, mxu_dtype=None))
    assert jnp.allclose(out_f32, ref, atol=1e-4, rtol=1e-4), "f32 path mismatch vs reference"

    # Exercise the 2-D (W-streaming) grid path with a wider d_model and forced col tiling.
    d_model2 = 256
    w2 = jax.random.normal(kw, (d_feat, d_model2), dtype=jnp.float32) / jnp.sqrt(d_feat)
    bias2 = 0.1 * jax.random.normal(kbias, (d_model2,), dtype=jnp.float32)
    ref2 = _reference(x, gamma, beta, w2, bias2)
    out2 = jax.block_until_ready(
        feat_embedding(x, gamma, beta, w2, bias2, mxu_dtype=None, col_tile=128))
    assert jnp.allclose(out2, ref2, atol=1e-4, rtol=1e-4), "N-tiled path mismatch vs reference"

    print("KERNEL_OK")
</pallas_src>

<mosaic_0001>
module attributes {stable_mosaic.version = 11 : i64} {
  func.func @_feat_embedding_kernel(%arg0: i32, %arg1: memref<16x32xf32, #tpu.memory_space<vmem>>, %arg2: memref<1x32xf32, #tpu.memory_space<vmem>>, %arg3: memref<1x32xf32, #tpu.memory_space<vmem>>, %arg4: memref<32x32xbf16, #tpu.memory_space<vmem>>, %arg5: memref<1x32xf32, #tpu.memory_space<vmem>>, %arg6: memref<16x32xf32, #tpu.memory_space<vmem>>) attributes {dimension_semantics = [#tpu.dimension_semantics<parallel>], iteration_bounds = array<i64: 1>, scalar_prefetch = 0 : i64, scratch_operands = 0 : i64, tpu.core_type = #tpu.core_type<tc>, window_params = [{transform_indices = @transform_0, window_bounds = array<i64: 16, 32>}, {pipeline_mode = #tpu.pipeline_mode<synchronous>, transform_indices = @transform_1, window_bounds = array<i64: 1, 32>}, {pipeline_mode = #tpu.pipeline_mode<synchronous>, transform_indices = @transform_2, window_bounds = array<i64: 1, 32>}, {pipeline_mode = #tpu.pipeline_mode<synchronous>, transform_indices = @transform_3, window_bounds = array<i64: 32, 32>}, {pipeline_mode = #tpu.pipeline_mode<synchronous>, transform_indices = @transform_4, window_bounds = array<i64: 1, 32>}, {transform_indices = @transform_5, window_bounds = array<i64: 16, 32>}]} {
    %c0 = arith.constant 0 : index
    %c0_0 = arith.constant 0 : index
    %0 = vector.load %arg1[%c0, %c0_0] : memref<16x32xf32, #tpu.memory_space<vmem>>, vector<16x32xf32>
    %cst = arith.constant dense<0.000000e+00> : vector<16xf32>
    %1 = vector.multi_reduction <add>, %0, %cst [1] : vector<16x32xf32> to vector<16xf32>
    %2 = vector.shape_cast %1 : vector<16xf32> to vector<16x1xf32>
    %cst_1 = arith.constant 3.200000e+01 : f32
    %3 = vector.broadcast %cst_1 : f32 to vector<16x1xf32>
    %4 = arith.divf %2, %3 : vector<16x1xf32>
    %5 = vector.broadcast %4 : vector<16x1xf32> to vector<16x32xf32>
    %6 = arith.subf %0, %5 : vector<16x32xf32>
    %7 = arith.mulf %6, %6 : vector<16x32xf32>
    %cst_2 = arith.constant dense<0.000000e+00> : vector<16xf32>
    %8 = vector.multi_reduction <add>, %7, %cst_2 [1] : vector<16x32xf32> to vector<16xf32>
    %9 = vector.shape_cast %8 : vector<16xf32> to vector<16x1xf32>
    %cst_3 = arith.constant 0.0322580636 : f32
    %10 = vector.broadcast %cst_3 : f32 to vector<16x1xf32>
    %11 = arith.mulf %9, %10 : vector<16x1xf32>
    %12 = math.sqrt %11 : vector<16x1xf32>
    %cst_4 = arith.constant 9.99999997E-7 : f32
    %13 = vector.broadcast %cst_4 : f32 to vector<16x1xf32>
    %14 = arith.addf %12, %13 : vector<16x1xf32>
    %15 = tpu.reciprocal %14 {approx = true} : vector<16x1xf32> -> vector<16x1xf32>
    %c0_5 = arith.constant 0 : index
    %c0_6 = arith.constant 0 : index
    %16 = vector.load %arg2[%c0_5, %c0_6] : memref<1x32xf32, #tpu.memory_space<vmem>>, vector<1x32xf32>
    %17 = vector.broadcast %16 : vector<1x32xf32> to vector<16x32xf32>
    %18 = vector.broadcast %15 : vector<16x1xf32> to vector<16x32xf32>
    %19 = arith.mulf %17, %18 : vector<16x32xf32>
    %20 = arith.mulf %6, %19 : vector<16x32xf32>
    %c0_7 = arith.constant 0 : index
    %c0_8 = arith.constant 0 : index
    %21 = vector.load %arg3[%c0_7, %c0_8] : memref<1x32xf32, #tpu.memory_space<vmem>>, vector<1x32xf32>
    %22 = vector.broadcast %21 : vector<1x32xf32> to vector<16x32xf32>
    %23 = arith.addf %20, %22 : vector<16x32xf32>
    %24 = arith.truncf %23 : vector<16x32xf32> to vector<16x32xbf16>
    %c0_9 = arith.constant 0 : index
    %c0_10 = arith.constant 0 : index
    %25 = vector.load %arg4[%c0_9, %c0_10] : memref<32x32xbf16, #tpu.memory_space<vmem>>, vector<32x32xbf16>
    %cst_11 = arith.constant dense<0.000000e+00> : vector<16x32xf32>
    %26 = tpu.matmul %24, %25, %cst_11 {dimension_numbers = #tpu.dot_dimension_numbers<[1], [0], [0], [1], [0, 0, 1, 1], [], []>} : vector<16x32xbf16>, vector<32x32xbf16>, vector<16x32xf32> -> vector<16x32xf32>
    %c0_12 = arith.constant 0 : index
    %c0_13 = arith.constant 0 : index
    %27 = vector.load %arg5[%c0_12, %c0_13] : memref<1x32xf32, #tpu.memory_space<vmem>>, vector<1x32xf32>
    %28 = vector.broadcast %27 : vector<1x32xf32> to vector<16x32xf32>
    %29 = arith.addf %26, %28 : vector<16x32xf32>
    %c0_14 = arith.constant 0 : index
    %c0_15 = arith.constant 0 : index
    %30 = vector.load %arg6[%c0_14, %c0_15] : memref<16x32xf32, #tpu.memory_space<vmem>>, vector<16x32xf32>
    tpu.vector_store %arg6[%c0_14, %c0_15], %29 {strides = array<i32>} : memref<16x32xf32, #tpu.memory_space<vmem>>, vector<16x32xf32>,
    return
  }
  func.func @transform_0(%arg0: i32) -> (i32, i32) {
    %c0_i32 = arith.constant 0 : i32
    %c0_i32_0 = arith.constant 0 : i32
    return %arg0, %c0_i32 : i32, i32
  }
  func.func @transform_1(%arg0: i32) -> (i32, i32) {
    %c0_i32 = arith.constant 0 : i32
    %c0_i32_0 = arith.constant 0 : i32
    %c0_i32_1 = arith.constant 0 : i32
    return %c0_i32, %c0_i32_0 : i32, i32
  }
  func.func @transform_2(%arg0: i32) -> (i32, i32) {
    %c0_i32 = arith.constant 0 : i32
    %c0_i32_0 = arith.constant 0 : i32
    %c0_i32_1 = arith.constant 0 : i32
    return %c0_i32, %c0_i32_0 : i32, i32
  }
  func.func @transform_3(%arg0: i32) -> (i32, i32) {
    %c0_i32 = arith.constant 0 : i32
    %c0_i32_0 = arith.constant 0 : i32
    %c0_i32_1 = arith.constant 0 : i32
    return %c0_i32, %c0_i32_0 : i32, i32
  }
  func.func @transform_4(%arg0: i32) -> (i32, i32) {
    %c0_i32 = arith.constant 0 : i32
    %c0_i32_0 = arith.constant 0 : i32
    %c0_i32_1 = arith.constant 0 : i32
    return %c0_i32, %c0_i32_0 : i32, i32
  }
  func.func @transform_5(%arg0: i32) -> (i32, i32) {
    %c0_i32 = arith.constant 0 : i32
    %c0_i32_0 = arith.constant 0 : i32
    return %arg0, %c0_i32 : i32, i32
  }
}

</mosaic_0001>

<llo_original>
// kernel: feat_embedding_apply.1
$region0: #{feat_embedding_apply.1}
  #allocation0 [shape = 'u32[]', space=smem, size = 0x4, offset = 0x4, fixed_abs, tag = 'smem constant byte address 0x4 - core index']
  #allocation1 [shape = 'u32[144,128]{1,0:T(1,128)}', space=vmem, size = 0x12000, scoped, tag = 'internal scratch']
  %s0 = inlined_call_operand.hbm [shape: f32[16,32], index: 0, kind: input, shape index: {}]
  %s1 = inlined_call_operand.vmem [shape: f32[1,32], index: 1, kind: input, shape index: {}]
  %s2 = inlined_call_operand.vmem [shape: f32[1,32], index: 2, kind: input, shape index: {}]
  %s3 = inlined_call_operand.hbm [shape: bf16[32,32], index: 3, kind: input, shape index: {}]
  %s4 = inlined_call_operand.vmem [shape: f32[1,32], index: 4, kind: input, shape index: {}]
  %s5 = inlined_call_operand.hbm [shape: f32[16,32], index: 5, kind: output, shape index: {}]
  %s6 = sld [smem:[#allocation0]]
  $region38: #{feat_embedding_apply.1} parent=0
    _
  %s8 = ssub.s32 1, %s6
  %s9 = scalar_select 0, %s8, %s6
  $region1: #{feat_embedding_apply.1} parent=0
    #allocation2 [shape = 'u8[8192]{0}', space=vmem, size = 0x2000, scoped, tag = 'input window, operand 0, single buffered']
    #allocation3 [shape = 's32[1]{0}', space=sflag, size = 0x4, scoped, tag = 'scoped memory for feat_embedding_apply.1']
    #allocation4 [shape = 's32[1]{0}', space=sflag, size = 0x4, scoped, tag = 'scoped memory for feat_embedding_apply.1']
    #allocation5 [shape = 'u8[8192]{0}', space=vmem, size = 0x2000, scoped, tag = 'input window, operand 3, single buffered']
    #allocation6 [shape = 's32[1]{0}', space=sflag, size = 0x4, scoped, tag = 'scoped memory for feat_embedding_apply.1']
    #allocation7 [shape = 'u8[8192]{0}', space=vmem, size = 0x2000, scoped, tag = 'output window, operand 0, single buffered']
    %10 = vsyncpa [#allocation3], 0
    %11 = vsyncpa [#allocation6], 0
    %12 = vsyncpa [#allocation4], 0
    // Predicated region
    $region2: #{feat_embedding_apply.1} parent=1 // pred_check
      _
    $region3: #{feat_embedding_apply.1} parent=1 // pred_check_branch
      %14 = sbr.rel (0) target = $region5
    $region4: #{feat_embedding_apply.1} parent=1 // pred_region
      %s16 = ssub.s32 256, 256
      %17 = vsyncadd [#allocation3], %s16
      %s18 = sshll.u32 [#allocation2], 4
      %s19 = int_to_ptr.vmem [resolvable:$true] %s18
      %24 = dma.hbm_to_vmem [thread:$0]  %s0, 256, %s19, [#allocation3], 128, 128, 8
    $region5: #{feat_embedding_apply.1} parent=1 // pred_fallthru
      _
    // Predicated region
    $region6: #{feat_embedding_apply.1} parent=1 // pred_check
      _
    $region7: #{feat_embedding_apply.1} parent=1 // pred_check_branch
      %26 = sbr.rel (0) target = $region9
    $region8: #{feat_embedding_apply.1} parent=1 // pred_region
      _
    $region9: #{feat_embedding_apply.1} parent=1 // pred_fallthru
      _
    // Predicated region
    $region10: #{feat_embedding_apply.1} parent=1 // pred_check
      _
    $region11: #{feat_embedding_apply.1} parent=1 // pred_check_branch
      %28 = sbr.rel (0) target = $region13
    $region12: #{feat_embedding_apply.1} parent=1 // pred_region
      _
    $region13: #{feat_embedding_apply.1} parent=1 // pred_fallthru
      _
    // Predicated region
    $region14: #{feat_embedding_apply.1} parent=1 // pred_check
      _
    $region15: #{feat_embedding_apply.1} parent=1 // pred_check_branch
      %30 = sbr.rel (0) target = $region17
    $region16: #{feat_embedding_apply.1} parent=1 // pred_region
      %s32 = ssub.s32 256, 256
      %33 = vsyncadd [#allocation6], %s32
      %s34 = sshll.u32 [#allocation5], 4
      %s35 = int_to_ptr.vmem [resolvable:$true] %s34
      %40 = dma.hbm_to_vmem [thread:$0]  %s3, 256, %s35, [#allocation6], 64, 64, 4
    $region17: #{feat_embedding_apply.1} parent=1 // pred_fallthru
      _
    // Predicated region
    $region18: #{feat_embedding_apply.1} parent=1 // pred_check
      _
    $region19: #{feat_embedding_apply.1} parent=1 // pred_check_branch
      %42 = sbr.rel (0) target = $region21
    $region20: #{feat_embedding_apply.1} parent=1 // pred_region
      _
    $region21: #{feat_embedding_apply.1} parent=1 // pred_fallthru
      _
    // Predicated region
    $region22: #{feat_embedding_apply.1} parent=1 // pred_check
      _
    $region23: #{feat_embedding_apply.1} parent=1 // pred_check_branch
      %44 = sbr.rel (0) target = $region25
    $region24: #{feat_embedding_apply.1} parent=1 // pred_region
      %45 = dma.done [#allocation3], 256
    $region25: #{feat_embedding_apply.1} parent=1 // pred_fallthru
      _
    // Predicated region
    $region26: #{feat_embedding_apply.1} parent=1 // pred_check
      _
    $region27: #{feat_embedding_apply.1} parent=1 // pred_check_branch
      %47 = sbr.rel (0) target = $region29
    $region28: #{feat_embedding_apply.1} parent=1 // pred_region
      %48 = dma.done [#allocation6], 256
    $region29: #{feat_embedding_apply.1} parent=1 // pred_fallthru
      _
    %v50 = vld [vmem:[#allocation2] sm:$0xff]
    %v51 = vld [vmem:[#allocation2 + $0x8] sm:$0xff]
    %vm52 = vcmask 261120
    %v53 = vsel %vm52, %v50, 0.0
    %54 = vadd.xlane.f32.xlu0 %v53
    %v55 = vpop.xlane.xlu0 %54
    %v56 = vsel %vm52, %v51, 0.0
    %57 = vadd.xlane.f32.xlu0 %v56
    %v58 = vpop.xlane.xlu0 %57
    %v59 = vrcp.pop 32.0
    %v60 = vmul.f32 %v55, %v59
    %v61 = vmul.f32 %v58, %v59
    %v62 = vsub.f32 %v50, %v60
    %v63 = vsub.f32 %v51, %v61
    %v64 = vmul.f32 %v62, %v62
    %v65 = vmul.f32 %v63, %v63
    %v66 = vsel %vm52, %v64, 0.0
    %67 = vadd.xlane.f32.xlu0 %v66
    %v68 = vpop.xlane.xlu0 %67
    %v69 = vsel %vm52, %v65, 0.0
    %70 = vadd.xlane.f32.xlu0 %v69
    %v71 = vpop.xlane.xlu0 %70
    %v72 = vmul.f32 %v68, 0.032258064
    %v73 = vmul.f32 %v71, 0.032258064
    %v74 = vrsqrt.pop %v72
    %v75 = vmul.f32 %v72, %v74
    %vm76 = vcmp.eq.f32.partialorder %v72, inf
    %v77 = vsel %vm76, %v72, %v75
    %vm78 = vcmp.eq.f32.partialorder %v72, 0.0
    %v79 = vand.u32 %v72, 2147483648
    %v80 = vsel %vm78, %v79, %v77
    %v81 = vrsqrt.pop %v73
    %v82 = vmul.f32 %v73, %v81
    %vm83 = vcmp.eq.f32.partialorder %v73, inf
    %v84 = vsel %vm83, %v73, %v82
    %vm85 = vcmp.eq.f32.partialorder %v73, 0.0
    %v86 = vand.u32 %v73, 2147483648
    %v87 = vsel %vm85, %v86, %v84
    %v88 = vadd.f32 %v80, 1e-06
    %v89 = vadd.f32 %v87, 1e-06
    %v90 = vrcp.pop %v88
    %v91 = vrcp.pop %v89
    %v92 = vld [vmem:[%s1] sm:$0x1]
    %v94 = vlaneseq
    %v95 = vshrl.u32 %v94, 7
    %v96 = vsub.s32 0, %v95
    %v97 = vrot.slane %v92, %v96
    %v99 = vmul.f32 %v97, %v90
    %v100 = vmul.f32 %v97, %v91
    %v101 = vmul.f32 %v62, %v99
    %v102 = vmul.f32 %v63, %v100
    %v103 = vld [vmem:[%s2] sm:$0x1]
    %v105 = vlaneseq
    %v106 = vshrl.u32 %v105, 7
    %v107 = vsub.s32 0, %v106
    %v108 = vrot.slane %v103, %v107
    %v110 = vadd.f32 %v101, %v108
    %v111 = vadd.f32 %v102, %v108
    %v112 = vpack.c.bf16 %v111, %v110
    %v113 = vld [vmem:[#allocation5] sm:$0xf]
    %v114 = vld [vmem:[#allocation5 + $0x4] sm:$0xf]
    %v115 = vld [vmem:[#allocation5 + $0x8] sm:$0xf]
    %v116 = vld [vmem:[#allocation5 + $0xc] sm:$0xf]
    %v117 = vld [vmem:[%s4] sm:$0x1]
    %v119 = vlaneseq
    %v120 = vshrl.u32 %v119, 7
    %v121 = vsub.s32 0, %v120
    %v122 = vrot.slane %v117, %v121
    %v128 = vunpack.c.l.b16 %v113
    %v129 = vunpack.c.l.b16 %v114
    %v130 = vunpack.c.l.b16 %v115
    %v131 = vunpack.c.l.b16 %v116
    %v132 = vpack.c.b16 %v129, %v128
    %v133 = vpack.c.b16 %v131, %v130
    %v137 = vsel %vm52, %v112, 0
    %139 = vmatprep.subr.bf16.mxu0 0
    %140 = vmatpush1.bf16.msra.mxu0 %v132
    %141 = vmatprep.subr.bf16.mxu0 0
    %142 = vmatpush1.bf16.msra.mxu0 %v133
    %143 = vmatprep.subr.bf16.mxu0 0
    %144 = vmatpush1.bf16.msra.mxu0 0
    %145 = vmatprep.subr.bf16.mxu0 0
    %146 = vmatpush1.bf16.msra.mxu0 0
    %147 = vmatprep.subr.bf16.mxu0 0
    %148 = vmatpush1.bf16.msra.mxu0 0
    %149 = vmatprep.subr.bf16.mxu0 0
    %150 = vmatpush1.bf16.msra.mxu0 0
    %151 = vmatprep.subr.bf16.mxu0 0
    %152 = vmatpush1.bf16.msra.mxu0 0
    %153 = vmatprep.subr.bf16.mxu0 0
    %154 = vmatpush1.bf16.msra.mxu0 0
    %155 = vmatprep.subr.bf16.mxu0 0
    %156 = vmatpush1.bf16.msra.mxu0 0
    %157 = vmatprep.subr.bf16.mxu0 0
    %158 = vmatpush1.bf16.msra.mxu0 0
    %159 = vmatprep.subr.bf16.mxu0 0
    %160 = vmatpush1.bf16.msra.mxu0 0
    %161 = vmatprep.subr.bf16.mxu0 0
    %162 = vmatpush1.bf16.msra.mxu0 0
    %163 = vmatprep.subr.bf16.mxu0 0
    %164 = vmatpush1.bf16.msra.mxu0 0
    %165 = vmatprep.subr.bf16.mxu0 0
    %166 = vmatpush1.bf16.msra.mxu0 0
    %167 = vmatprep.subr.bf16.mxu0 0
    %168 = vmatpush1.bf16.msra.mxu0 0
    %169 = vmatprep.subr.bf16.mxu0 0
    %170 = vmatpush1.bf16.msra.mxu0 0
    %171 = vmatprep.mubr.bf16.mxu0 0
    %172 = vmatmul.mubr.bf16.gmra.mrb[0].mxu0 %v137
    %v173 = vpop.f32.mrb[0].mxu0
    %v174 = vadd.f32 %v122, %v173
    %v175 = vpop.f32.mrb[0].mxu0
    %v176 = vpop.f32.mrb[0].mxu0
    %v177 = vadd.f32 %v122, %v176
    %v178 = vpop.f32.mrb[0].mxu0
    %179 = vdwg.mxu0
    %180 = vst.msk [vmem:[#allocation7] sm:$0xff] %vm52, %v174
    %181 = vst.msk [vmem:[#allocation7 + $0x8] sm:$0xff] %vm52, %v177
    // Predicated region
    $region30: #{feat_embedding_apply.1} parent=1 // pred_check
      _
    $region31: #{feat_embedding_apply.1} parent=1 // pred_check_branch
      %183 = sbr.rel (0) target = $region33
    $region32: #{feat_embedding_apply.1} parent=1 // pred_region
      %s185 = ssub.s32 256, 256
      %186 = vsyncadd [#allocation4], %s185
      %s187 = sshll.u32 [#allocation7], 4
      %s188 = int_to_ptr.vmem [resolvable:$true] %s187
      %193 = dma.vmem_to_hbm [thread:$0]  %s188, 256, %s5, [#allocation4], 128, 128, 8
    $region33: #{feat_embedding_apply.1} parent=1 // pred_fallthru
      _
    // Predicated region
    $region34: #{feat_embedding_apply.1} parent=1 // pred_check
      _
    $region35: #{feat_embedding_apply.1} parent=1 // pred_check_branch
      %195 = sbr.rel (0) target = $region37
    $region36: #{feat_embedding_apply.1} parent=1 // pred_region
      %196 = dma.done [#allocation4], 256
    $region37: #{feat_embedding_apply.1} parent=1 // pred_fallthru
      _
    %197 = vsyncpa [#allocation3], 1
    %198 = vsyncpa [#allocation6], 1
    %199 = vsyncpa [#allocation4], 1

</llo_original>
